<compile_context>
chip_gen: v5e
topology: v5e:2x2
jax: 0.10.0
libtpu: 0.0.40
codegen_flags: <defaults>
</compile_context>

<pallas_src>
import functools

import jax
import jax.numpy as jnp
from jax.experimental import pallas as pl
from jax.experimental.pallas import tpu as pltpu


# ----------------------------------------------------------------------------
# Kernels
# ----------------------------------------------------------------------------
def _fused_kernel(x_ref, w1_ref, b1_ref, w2_ref, b2_ref, o_ref):
    """Pool + shared MLP + sigmoid gate + scale for an (Nb, C, HW) block."""
    x = x_ref[...].astype(jnp.float32)                       # (Nb, C, HW)
    nb, _, hw = x.shape

    avg = jnp.sum(x, axis=2) * (1.0 / hw)                    # (Nb, C)
    mx = jnp.max(x, axis=2)                                   # (Nb, C)

    # Single first-layer GEMM for both pooled vectors; second layer folded:
    #   fc(avg)+fc(mx) = (relu(avg@W1+b1) + relu(mx@W1+b1)) @ W2 + 2*b2
    pooled = jnp.concatenate([avg, mx], axis=0)               # (2*Nb, C)
    h = jnp.maximum(
        jnp.dot(pooled, w1_ref[...], preferred_element_type=jnp.float32)
        + b1_ref[...], 0.0)                                   # (2*Nb, Ch)
    logits = (jnp.dot(h[:nb] + h[nb:], w2_ref[...],
                      preferred_element_type=jnp.float32)
              + 2.0 * b2_ref[...])                            # (Nb, C)

    scale = 1.0 / (1.0 + jnp.exp(-logits))                    # (Nb, C), exp on EUP
    o_ref[...] = (x * scale[:, :, None]).astype(o_ref.dtype)


def _make_pool_mlp_kernel(hw_true):
    """Two-pass path, pass 1: HW-tiled pooling + MLP -> per-sample (1, C, 1) gate."""
    def kernel(x_ref, w1_ref, b1_ref, w2_ref, b2_ref, gate_ref, sum_acc, max_acc):
        k = pl.program_id(1)

        @pl.when(k == 0)
        def _():
            sum_acc[...] = jnp.zeros_like(sum_acc)
            max_acc[...] = jnp.full_like(max_acc, -jnp.inf)

        x = x_ref[...].astype(jnp.float32)                    # (1, C, tHW)
        sum_acc[...] += jnp.sum(x, axis=2)
        max_acc[...] = jnp.maximum(max_acc[...], jnp.max(x, axis=2))

        @pl.when(k == pl.num_programs(1) - 1)
        def _():
            avg = sum_acc[...] * (1.0 / hw_true)              # (1, C)
            pooled = jnp.concatenate([avg, max_acc[...]], axis=0)   # (2, C)
            h = jnp.maximum(
                jnp.dot(pooled, w1_ref[...], preferred_element_type=jnp.float32)
                + b1_ref[...], 0.0)
            logits = (jnp.dot(h[:1] + h[1:], w2_ref[...],
                              preferred_element_type=jnp.float32)
                      + 2.0 * b2_ref[...])                    # (1, C)
            scale = 1.0 / (1.0 + jnp.exp(-logits))
            gate_ref[...] = scale[:, :, None]                 # (1, C, 1)

    return kernel


def _scale_kernel(gate_ref, x_ref, o_ref):
    """Two-pass path, pass 2: broadcast multiply over an (1, C, tHW) tile."""
    x = x_ref[...].astype(jnp.float32)                        # (1, C, tHW)
    o_ref[...] = (x * gate_ref[...]).astype(o_ref.dtype)      # gate: (1, C, 1)


# ----------------------------------------------------------------------------
# Sizing helpers
# ----------------------------------------------------------------------------
def _vmem_budget_bytes():
    """~7/8 of physical VMEM: ~56 MiB on v7x, ~112 MiB on v5e/v6e."""
    try:
        phys = int(pltpu.get_tpu_info().vmem_capacity_bytes)
    except Exception:
        phys = 64 * 1024 * 1024          # conservative fallback (v7x)
    return (phys * 7) // 8


def _pick_nb(n, per_sample_bytes, max_nb, target_bytes=4 << 20):
    """Samples per grid step: reach ~target bytes/step, keep >=2 steps if possible."""
    cap = max(1, min(n, int(max_nb)))
    divisors = [d for d in range(1, cap + 1) if n % d == 0]
    pick = next((d for d in divisors if d * per_sample_bytes >= target_bytes),
                divisors[-1])
    if n // pick < 2:
        smaller = [d for d in divisors if n // d >= 2]
        if smaller:
            pick = smaller[-1]            # fewest steps while still >=2 (megacore)
    return pick


def _pick_thw(hw, c, itemsize, avail_bytes):
    """HW tile: multiple of 128 (lane-dense) dividing HW, fitting the VMEM budget."""
    cands = [d for d in range(128, hw, 128) if hw % d == 0]
    cands.append(hw)                      # full extent is always a legal block dim
    fitting = [d for d in cands if 4 * c * d * itemsize <= avail_bytes]
    return fitting[-1] if fitting else cands[0]


# ----------------------------------------------------------------------------
# Wrapper
# ----------------------------------------------------------------------------
def channel_attention(x, params, *, force_two_pass=False, force_thw=None):
    """x: (N, C, H, W). params: w1 (C, Ch), b1 (1, Ch), w2 (Ch, C), b2 (1, C)."""
    N, C, H, W = x.shape
    HW = H * W
    w1, b1, w2, b2 = params["w1"], params["b1"], params["w2"], params["b2"]
    Ch = w1.shape[1]
    itemsize = x.dtype.itemsize

    # Free, layout-preserving view of contiguous NCHW; HW lands on lanes.
    # TODO(synk): if H*W is not a multiple of 128, stores are masked (vst.msk);
    # padding HW in the wrapper would make them lane-dense at extra traffic.
    x2 = x.reshape(N, C, HW)

    budget = _vmem_budget_bytes()
    weight_raw = (C * Ch + Ch + Ch * C + C) * 4
    weight_bytes = 2 * weight_raw                      # double-buffered weight blocks
    slack = 2 << 20
    per_sample = C * HW * itemsize
    avail = budget - weight_bytes - slack
    max_nb = avail // (4 * per_sample) if per_sample > 0 else 0

    if max_nb >= 1 and not force_two_pass:
        # ---------------- fused single-pass path ----------------
        nb = _pick_nb(N, per_sample, max_nb)
        need = 4 * nb * per_sample + weight_bytes + slack
        vmem_limit = int(min(budget, max(need, 16 << 20)))
        out = pl.pallas_call(
            _fused_kernel,
            out_shape=jax.ShapeDtypeStruct((N, C, HW), x.dtype),
            grid=(N // nb,),
            in_specs=[
                pl.BlockSpec((nb, C, HW), lambda i: (i, 0, 0)),   # x slab
                pl.BlockSpec((C, Ch), lambda i: (0, 0)),          # w1 (resident)
                pl.BlockSpec((1, Ch), lambda i: (0, 0)),          # b1
                pl.BlockSpec((Ch, C), lambda i: (0, 0)),          # w2
                pl.BlockSpec((1, C), lambda i: (0, 0)),           # b2
            ],
            out_specs=pl.BlockSpec((nb, C, HW), lambda i: (i, 0, 0)),
            compiler_params=pltpu.CompilerParams(
                dimension_semantics=("parallel",),
                vmem_limit_bytes=vmem_limit,
            ),
            cost_estimate=pl.CostEstimate(
                flops=int(2 * N * (2 * C * Ch + Ch * C) + 4 * N * C * HW),
                transcendentals=int(N * C),
                bytes_accessed=int(2 * N * per_sample + weight_raw),
            ),
        )(x2, w1, b1, w2, b2)
        return out.reshape(N, C, H, W)

    # ---------------- two-pass fallback (slab too big for VMEM) ----------------
    thw = int(force_thw) if force_thw is not None else _pick_thw(HW, C, itemsize, avail)
    assert HW % thw == 0, "HW tile must divide H*W"
    kh = HW // thw

    # Pass 1: tiled pooling + MLP -> gates (N, C, 1) in f32.
    pool_need = 2 * C * thw * itemsize + weight_bytes + 4 * C * 4 + slack
    gates = pl.pallas_call(
        _make_pool_mlp_kernel(HW),
        out_shape=jax.ShapeDtypeStruct((N, C, 1), jnp.float32),
        grid=(N, kh),
        in_specs=[
            pl.BlockSpec((1, C, thw), lambda n, k: (n, 0, k)),
            pl.BlockSpec((C, Ch), lambda n, k: (0, 0)),
            pl.BlockSpec((1, Ch), lambda n, k: (0, 0)),
            pl.BlockSpec((Ch, C), lambda n, k: (0, 0)),
            pl.BlockSpec((1, C), lambda n, k: (0, 0)),
        ],
        out_specs=pl.BlockSpec((1, C, 1), lambda n, k: (n, 0, 0)),
        scratch_shapes=[pltpu.VMEM((1, C), jnp.float32),     # running sum
                        pltpu.VMEM((1, C), jnp.float32)],    # running max
        compiler_params=pltpu.CompilerParams(
            dimension_semantics=("parallel", "arbitrary"),
            vmem_limit_bytes=int(min(budget, max(pool_need, 16 << 20))),
        ),
        cost_estimate=pl.CostEstimate(
            flops=int(2 * N * C * HW + 2 * N * (2 * C * Ch + Ch * C)),
            transcendentals=int(N * C),
            bytes_accessed=int(N * per_sample + N * C * 4 + weight_raw),
        ),
    )(x2, w1, b1, w2, b2)

    # Pass 2: fully parallel broadcast multiply (two parallel axes -> v7x megacore
    # stays busy even at N=1).
    scale_need = 4 * C * thw * itemsize + 2 * C * 4 + slack
    out = pl.pallas_call(
        _scale_kernel,
        out_shape=jax.ShapeDtypeStruct((N, C, HW), x.dtype),
        grid=(N, kh),
        in_specs=[
            pl.BlockSpec((1, C, 1), lambda n, k: (n, 0, 0)),      # gate
            pl.BlockSpec((1, C, thw), lambda n, k: (n, 0, k)),    # x tile
        ],
        out_specs=pl.BlockSpec((1, C, thw), lambda n, k: (n, 0, k)),
        compiler_params=pltpu.CompilerParams(
            dimension_semantics=("parallel", "parallel"),
            vmem_limit_bytes=int(min(budget, max(scale_need, 16 << 20))),
        ),
        cost_estimate=pl.CostEstimate(
            flops=int(N * C * HW),
            transcendentals=0,
            bytes_accessed=int(2 * N * per_sample + N * C * 4),
        ),
    )(gates, x2)
    return out.reshape(N, C, H, W)


# ----------------------------------------------------------------------------
# Plain-JAX reference and parameter init.
# ----------------------------------------------------------------------------
def channel_attention_ref(x, params):
    x = x.astype(jnp.float32)
    avg = jnp.mean(x, axis=(2, 3))                            # (N, C)
    mx = jnp.max(x, axis=(2, 3))                              # (N, C)

    def fc(v):
        h = jnp.maximum(v @ params["w1"] + params["b1"], 0.0)
        return h @ params["w2"] + params["b2"]

    scale = jax.nn.sigmoid(fc(avg) + fc(mx))                  # (N, C)
    return x * scale[:, :, None, None]


def init_params(key, channels, reduction_ratio=16):
    hidden = max(channels // reduction_ratio, 1)
    k1, k2, k3, k4 = jax.random.split(key, 4)
    return {
        # Stored pre-transposed vs. torch.nn.Linear: y = x @ W + b.
        "w1": 0.1 * jax.random.normal(k1, (channels, hidden), jnp.float32),
        "b1": 0.1 * jax.random.normal(k2, (1, hidden), jnp.float32),
        "w2": 0.1 * jax.random.normal(k3, (hidden, channels), jnp.float32),
        "b2": 0.1 * jax.random.normal(k4, (1, channels), jnp.float32),
    }


if __name__ == "__main__":
    key = jax.random.PRNGKey(0)
    k_x, k_p = jax.random.split(key)

    # channels must be >= reduction_ratio (16) for a non-empty hidden layer.
    N, C, H, W = 2, 64, 16, 16
    x = jax.random.normal(k_x, (N, C, H, W), dtype=jnp.float32)
    params = init_params(k_p, C, reduction_ratio=16)
    ref = channel_attention_ref(x, params)

    # 1) Default path (fused single pass at this shape).
    out = jax.block_until_ready(jax.jit(channel_attention)(x, params))
    assert out.shape == (N, C, H, W) and out.dtype == x.dtype
    assert bool(jnp.all(jnp.isfinite(out)))
    err = float(jnp.max(jnp.abs(out - ref)))
    assert err < 5e-3, f"fused path max abs error {err}"

    # 2) Two-pass fallback (forced, HW tiled at 128) — same semantics.
    two_pass = jax.jit(functools.partial(channel_attention,
                                         force_two_pass=True, force_thw=128))
    out2 = jax.block_until_ready(two_pass(x, params))
    err2 = float(jnp.max(jnp.abs(out2 - ref)))
    assert err2 < 5e-3, f"two-pass path max abs error {err2}"

    # 3) bf16 I/O path (compute stays f32, traffic halved).
    xb = x.astype(jnp.bfloat16)
    outb = jax.block_until_ready(jax.jit(channel_attention)(xb, params))
    assert outb.dtype == jnp.bfloat16
    errb = float(jnp.max(jnp.abs(outb.astype(jnp.float32) - ref)))
    assert errb < 1.5e-1, f"bf16 path max abs error {errb}"

    print("KERNEL_OK")
</pallas_src>

<mosaic_0001>
module attributes {stable_mosaic.version = 11 : i64} {
  func.func @_fused_kernel(%arg0: i32, %arg1: memref<1x64x256xf32, #tpu.memory_space<vmem>>, %arg2: memref<64x4xf32, #tpu.memory_space<vmem>>, %arg3: memref<1x4xf32, #tpu.memory_space<vmem>>, %arg4: memref<4x64xf32, #tpu.memory_space<vmem>>, %arg5: memref<1x64xf32, #tpu.memory_space<vmem>>, %arg6: memref<1x64x256xf32, #tpu.memory_space<vmem>>) attributes {dimension_semantics = [#tpu.dimension_semantics<parallel>], iteration_bounds = array<i64: 2>, scalar_prefetch = 0 : i64, scratch_operands = 0 : i64, tpu.core_type = #tpu.core_type<tc>, window_params = [{transform_indices = @transform_0, window_bounds = array<i64: 1, 64, 256>}, {pipeline_mode = #tpu.pipeline_mode<synchronous>, transform_indices = @transform_1, window_bounds = array<i64: 64, 4>}, {pipeline_mode = #tpu.pipeline_mode<synchronous>, transform_indices = @transform_2, window_bounds = array<i64: 1, 4>}, {pipeline_mode = #tpu.pipeline_mode<synchronous>, transform_indices = @transform_3, window_bounds = array<i64: 4, 64>}, {pipeline_mode = #tpu.pipeline_mode<synchronous>, transform_indices = @transform_4, window_bounds = array<i64: 1, 64>}, {transform_indices = @transform_5, window_bounds = array<i64: 1, 64, 256>}]} {
    %c0 = arith.constant 0 : index
    %c0_0 = arith.constant 0 : index
    %c0_1 = arith.constant 0 : index
    %0 = vector.load %arg1[%c0, %c0_0, %c0_1] : memref<1x64x256xf32, #tpu.memory_space<vmem>>, vector<1x64x256xf32>
    %cst = arith.constant dense<0.000000e+00> : vector<1x64xf32>
    %1 = vector.multi_reduction <add>, %0, %cst [2] : vector<1x64x256xf32> to vector<1x64xf32>
    %cst_2 = arith.constant 3.906250e-03 : f32
    %2 = vector.broadcast %cst_2 : f32 to vector<1x64xf32>
    %3 = arith.mulf %1, %2 : vector<1x64xf32>
    %cst_3 = arith.constant dense<0xFF800000> : vector<1x64xf32>
    %4 = vector.multi_reduction <maximumf>, %0, %cst_3 [2] : vector<1x64x256xf32> to vector<1x64xf32>
    %5 = tpu.concatenate %3, %4 in 0 : vector<1x64xf32>, vector<1x64xf32> -> vector<2x64xf32>
    %c0_4 = arith.constant 0 : index
    %c0_5 = arith.constant 0 : index
    %6 = vector.load %arg2[%c0_4, %c0_5] : memref<64x4xf32, #tpu.memory_space<vmem>>, vector<64x4xf32>
    %cst_6 = arith.constant dense<0.000000e+00> : vector<2x4xf32>
    %7 = tpu.matmul %5, %6, %cst_6 {dimension_numbers = #tpu.dot_dimension_numbers<[1], [0], [0], [1], [0, 0, 1, 1], [], []>} : vector<2x64xf32>, vector<64x4xf32>, vector<2x4xf32> -> vector<2x4xf32>
    %c0_7 = arith.constant 0 : index
    %c0_8 = arith.constant 0 : index
    %8 = vector.load %arg3[%c0_7, %c0_8] : memref<1x4xf32, #tpu.memory_space<vmem>>, vector<1x4xf32>
    %9 = vector.broadcast %8 : vector<1x4xf32> to vector<2x4xf32>
    %10 = arith.addf %7, %9 : vector<2x4xf32>
    %cst_9 = arith.constant 0.000000e+00 : f32
    %11 = vector.broadcast %cst_9 : f32 to vector<2x4xf32>
    %12 = arith.maximumf %10, %11 : vector<2x4xf32>
    %13 = vector.extract_strided_slice %12 {offsets = [0, 0], sizes = [1, 4], strides = [1, 1]} : vector<2x4xf32> to vector<1x4xf32>
    %14 = vector.extract_strided_slice %12 {offsets = [1, 0], sizes = [1, 4], strides = [1, 1]} : vector<2x4xf32> to vector<1x4xf32>
    %15 = arith.addf %13, %14 : vector<1x4xf32>
    %c0_10 = arith.constant 0 : index
    %c0_11 = arith.constant 0 : index
    %16 = vector.load %arg4[%c0_10, %c0_11] : memref<4x64xf32, #tpu.memory_space<vmem>>, vector<4x64xf32>
    %cst_12 = arith.constant dense<0.000000e+00> : vector<1x64xf32>
    %17 = tpu.matmul %15, %16, %cst_12 {dimension_numbers = #tpu.dot_dimension_numbers<[1], [0], [0], [1], [0, 0, 1, 1], [], []>} : vector<1x4xf32>, vector<4x64xf32>, vector<1x64xf32> -> vector<1x64xf32>
    %c0_13 = arith.constant 0 : index
    %c0_14 = arith.constant 0 : index
    %18 = vector.load %arg5[%c0_13, %c0_14] : memref<1x64xf32, #tpu.memory_space<vmem>>, vector<1x64xf32>
    %cst_15 = arith.constant 2.000000e+00 : f32
    %19 = vector.broadcast %cst_15 : f32 to vector<1x64xf32>
    %20 = arith.mulf %19, %18 : vector<1x64xf32>
    %21 = arith.addf %17, %20 : vector<1x64xf32>
    %cst_16 = arith.constant 0.000000e+00 : f32
    %22 = vector.broadcast %cst_16 : f32 to vector<1x64xf32>
    %23 = arith.subf %22, %21 : vector<1x64xf32>
    %24 = math.exp %23 : vector<1x64xf32>
    %cst_17 = arith.constant 1.000000e+00 : f32
    %25 = vector.broadcast %cst_17 : f32 to vector<1x64xf32>
    %26 = arith.addf %25, %24 : vector<1x64xf32>
    %cst_18 = arith.constant 1.000000e+00 : f32
    %27 = vector.broadcast %cst_18 : f32 to vector<1x64xf32>
    %28 = arith.divf %27, %26 : vector<1x64xf32>
    %29 = vector.shape_cast %28 : vector<1x64xf32> to vector<1x64x1xf32>
    %30 = vector.broadcast %29 : vector<1x64x1xf32> to vector<1x64x256xf32>
    %31 = arith.mulf %0, %30 : vector<1x64x256xf32>
    %c0_19 = arith.constant 0 : index
    %c0_20 = arith.constant 0 : index
    %c0_21 = arith.constant 0 : index
    %32 = vector.load %arg6[%c0_19, %c0_20, %c0_21] : memref<1x64x256xf32, #tpu.memory_space<vmem>>, vector<1x64x256xf32>
    tpu.vector_store %arg6[%c0_19, %c0_20, %c0_21], %31 {strides = array<i32>} : memref<1x64x256xf32, #tpu.memory_space<vmem>>, vector<1x64x256xf32>,
    return
  }
  func.func @transform_0(%arg0: i32) -> (i32, i32, i32) {
    %c0_i32 = arith.constant 0 : i32
    %c0_i32_0 = arith.constant 0 : i32
    %c0_i32_1 = arith.constant 0 : i32
    return %arg0, %c0_i32, %c0_i32_0 : i32, i32, i32
  }
  func.func @transform_1(%arg0: i32) -> (i32, i32) {
    %c0_i32 = arith.constant 0 : i32
    %c0_i32_0 = arith.constant 0 : i32
    %c0_i32_1 = arith.constant 0 : i32
    return %c0_i32, %c0_i32_0 : i32, i32
  }
  func.func @transform_2(%arg0: i32) -> (i32, i32) {
    %c0_i32 = arith.constant 0 : i32
    %c0_i32_0 = arith.constant 0 : i32
    %c0_i32_1 = arith.constant 0 : i32
    return %c0_i32, %c0_i32_0 : i32, i32
  }
  func.func @transform_3(%arg0: i32) -> (i32, i32) {
    %c0_i32 = arith.constant 0 : i32
    %c0_i32_0 = arith.constant 0 : i32
    %c0_i32_1 = arith.constant 0 : i32
    return %c0_i32, %c0_i32_0 : i32, i32
  }
  func.func @transform_4(%arg0: i32) -> (i32, i32) {
    %c0_i32 = arith.constant 0 : i32
    %c0_i32_0 = arith.constant 0 : i32
    %c0_i32_1 = arith.constant 0 : i32
    return %c0_i32, %c0_i32_0 : i32, i32
  }
  func.func @transform_5(%arg0: i32) -> (i32, i32, i32) {
    %c0_i32 = arith.constant 0 : i32
    %c0_i32_0 = arith.constant 0 : i32
    %c0_i32_1 = arith.constant 0 : i32
    return %arg0, %c0_i32, %c0_i32_0 : i32, i32, i32
  }
}

</mosaic_0001>

<llo_original>
// kernel: channel_attention.1
$region0: #{channel_attention.1}
  #allocation0 [shape = 'u32[]', space=smem, size = 0x4, offset = 0x4, fixed_abs, tag = 'smem constant byte address 0x4 - core index']
  #allocation1 [shape = 'u32[72,128]{1,0:T(1,128)}', space=vmem, size = 0x9000, scoped, tag = 'internal scratch']
  %s0 = inlined_call_operand.vmem [shape: f32[2,64,256], index: 0, kind: input, shape index: {}]
  %s1 = inlined_call_operand.vmem [shape: f32[64,4], index: 1, kind: input, shape index: {}]
  %s2 = inlined_call_operand.vmem [shape: f32[1,4], index: 2, kind: input, shape index: {}]
  %s3 = inlined_call_operand.vmem [shape: f32[4,64], index: 3, kind: input, shape index: {}]
  %s4 = inlined_call_operand.vmem [shape: f32[1,64], index: 4, kind: input, shape index: {}]
  %s5 = inlined_call_operand.vmem [shape: f32[2,64,256], index: 5, kind: output, shape index: {}]
  %s6 = sld [smem:[#allocation0]]
  $region53: #{channel_attention.1} parent=0
    _
  %s8 = ssub.s32 1, %s6
  %s9 = scalar_select 0, %s8, %s6
  loop: start=0, step=1, limit=4
  $region2: #{channel_attention.1} parent=0 // loop_pre_header
    _
  $region3: #{channel_attention.1} parent=0 // loop_header
    %s11 = sphi 0, %s15
    %p12 = scmp.ge.s32.totalorder %s11, 4
    %s21 = sphi 0, %s23
    %s24 = sphi 0, %s21
    %s25 = sphi 0, %s24
    %s41 = sphi 0, %s25
    %s45 = sphi 0, %s45
    %s47 = sphi 0, %s45
    %s48 = sphi 0, %s47
    %s62 = sphi 0, %s48
    %s66 = sphi 0, %s66
    %s68 = sphi 0, %s66
    %s69 = sphi 0, %s68
    %s83 = sphi 0, %s69
    %s87 = sphi 0, %s87
    %s89 = sphi 0, %s87
    %s90 = sphi 0, %s89
    %s104 = sphi 0, %s90
    %s108 = sphi 0, %s108
    %s110 = sphi 0, %s108
    %s111 = sphi 0, %s110
    %s125 = sphi 0, %s111
    %s131 = sphi 0, %s133
    %s134 = sphi 0, %s131
    %s135 = sphi 0, %s134
    %s151 = sphi 0, %s135
  $region4: #{channel_attention.1} parent=0 // loop_header_branch
    %14 = sbr.rel (%p12) target = $region8
  $region5: #{channel_attention.1} parent=0 // loop_body
    %s16 = ssub.s32 %s11, 1
    %s17 = ssub.s32 %s11, 2
    %s18 = sadd.s32 %s11, 1
    %s19 = ssub.s32 %s11, %s18
    %p20 = scmp.eq.s32.totalorder %s19, 0
    %s22 = sadd.s32 %s21, 1
    %s23 = scalar_select %p20, %s21, %s22
    %p26 = pneg %p20
    %p27 = scmp.eq.s32.totalorder %s11, 1
    %p28 = por %p26, %p27
    %p29 = scmp.ne.s32.totalorder %s21, %s24
    %p30 = scmp.eq.s32.totalorder %s11, 0
    %p31 = por %p29, %p30
    %p32 = scmp.ne.s32.totalorder %s21, %s24
    %p33 = scmp.eq.s32.totalorder %s16, 1
    %p34 = por %p32, %p33
    %p35 = scmp.ne.s32.totalorder %s24, %s25
    %p36 = scmp.eq.s32.totalorder %s16, 0
    %p37 = por %p35, %p36
    %p38 = scmp.ne.s32.totalorder %s24, %s25
    %p39 = scmp.eq.s32.totalorder %s17, 1
    %p40 = por %p38, %p39
    %p42 = scmp.ne.s32.totalorder %s25, %s41
    %p43 = scmp.eq.s32.totalorder %s17, 0
    %p44 = por %p42, %p43
    %s46 = sadd.s32 %s45, 1
    %p49 = scmp.eq.s32.totalorder %s11, 1
    %p50 = scmp.ne.s32.totalorder %s45, %s47
    %p51 = scmp.eq.s32.totalorder %s11, 0
    %p52 = por %p50, %p51
    %p53 = scmp.ne.s32.totalorder %s45, %s47
    %p54 = scmp.eq.s32.totalorder %s16, 1
    %p55 = por %p53, %p54
    %p56 = scmp.ne.s32.totalorder %s47, %s48
    %p57 = scmp.eq.s32.totalorder %s16, 0
    %p58 = por %p56, %p57
    %p59 = scmp.ne.s32.totalorder %s47, %s48
    %p60 = scmp.eq.s32.totalorder %s17, 1
    %p61 = por %p59, %p60
    %p63 = scmp.ne.s32.totalorder %s48, %s62
    %p64 = scmp.eq.s32.totalorder %s17, 0
    %p65 = por %p63, %p64
    %s67 = sadd.s32 %s66, 1
    %p70 = scmp.eq.s32.totalorder %s11, 1
    %p71 = scmp.ne.s32.totalorder %s66, %s68
    %p72 = scmp.eq.s32.totalorder %s11, 0
    %p73 = por %p71, %p72
    %p74 = scmp.ne.s32.totalorder %s66, %s68
    %p75 = scmp.eq.s32.totalorder %s16, 1
    %p76 = por %p74, %p75
    %p77 = scmp.ne.s32.totalorder %s68, %s69
    %p78 = scmp.eq.s32.totalorder %s16, 0
    %p79 = por %p77, %p78
    %p80 = scmp.ne.s32.totalorder %s68, %s69
    %p81 = scmp.eq.s32.totalorder %s17, 1
    %p82 = por %p80, %p81
    %p84 = scmp.ne.s32.totalorder %s69, %s83
    %p85 = scmp.eq.s32.totalorder %s17, 0
    %p86 = por %p84, %p85
    %s88 = sadd.s32 %s87, 1
    %p91 = scmp.eq.s32.totalorder %s11, 1
    %p92 = scmp.ne.s32.totalorder %s87, %s89
    %p93 = scmp.eq.s32.totalorder %s11, 0
    %p94 = por %p92, %p93
    %p95 = scmp.ne.s32.totalorder %s87, %s89
    %p96 = scmp.eq.s32.totalorder %s16, 1
    %p97 = por %p95, %p96
    %p98 = scmp.ne.s32.totalorder %s89, %s90
    %p99 = scmp.eq.s32.totalorder %s16, 0
    %p100 = por %p98, %p99
    %p101 = scmp.ne.s32.totalorder %s89, %s90
    %p102 = scmp.eq.s32.totalorder %s17, 1
    %p103 = por %p101, %p102
    %p105 = scmp.ne.s32.totalorder %s90, %s104
    %p106 = scmp.eq.s32.totalorder %s17, 0
    %p107 = por %p105, %p106
    %s109 = sadd.s32 %s108, 1
    %p112 = scmp.eq.s32.totalorder %s11, 1
    %p113 = scmp.ne.s32.totalorder %s108, %s110
    %p114 = scmp.eq.s32.totalorder %s11, 0
    %p115 = por %p113, %p114
    %p116 = scmp.ne.s32.totalorder %s108, %s110
    %p117 = scmp.eq.s32.totalorder %s16, 1
    %p118 = por %p116, %p117
    %p119 = scmp.ne.s32.totalorder %s110, %s111
    %p120 = scmp.eq.s32.totalorder %s16, 0
    %p121 = por %p119, %p120
    %p122 = scmp.ne.s32.totalorder %s110, %s111
    %p123 = scmp.eq.s32.totalorder %s17, 1
    %p124 = por %p122, %p123
    %p126 = scmp.ne.s32.totalorder %s111, %s125
    %p127 = scmp.eq.s32.totalorder %s17, 0
    %p128 = por %p126, %p127
    %s129 = ssub.s32 %s11, %s18
    %p130 = scmp.eq.s32.totalorder %s129, 0
    %s132 = sadd.s32 %s131, 1
    %s133 = scalar_select %p130, %s131, %s132
    %p136 = pneg %p130
    %p137 = scmp.eq.s32.totalorder %s11, 1
    %p138 = por %p136, %p137
    %p139 = scmp.ne.s32.totalorder %s131, %s134
    %p140 = scmp.eq.s32.totalorder %s11, 0
    %p141 = por %p139, %p140
    %p142 = scmp.ne.s32.totalorder %s131, %s134
    %p143 = scmp.eq.s32.totalorder %s16, 1
    %p144 = por %p142, %p143
    %p145 = scmp.ne.s32.totalorder %s134, %s135
    %p146 = scmp.eq.s32.totalorder %s16, 0
    %p147 = por %p145, %p146
    %p148 = scmp.ne.s32.totalorder %s134, %s135
    %p149 = scmp.eq.s32.totalorder %s17, 1
    %p150 = por %p148, %p149
    %p152 = scmp.ne.s32.totalorder %s135, %s151
    %p153 = scmp.eq.s32.totalorder %s17, 0
    %p154 = por %p152, %p153
    %p155 = scmp.le.s32.totalorder 1, %s11
    %p156 = scmp.lt.s32.totalorder %s11, 3
    %p157 = pnand %p155, %p156
    %p158 = pneg %p157
    // Predicated region
    $region9: #{channel_attention.1} parent=5 // pred_check
      _
    $region10: #{channel_attention.1} parent=5 // pred_check_branch
      %160 = sbr.rel (%p157) target = $region12
    $region11: #{channel_attention.1} parent=5 // pred_region
      %s161 = ssub.s32 %s11, 1
      // Predicated region
      $region13: #{channel_attention.1} parent=11 // pred_check
        %p162 = pneg %p58
      $region14: #{channel_attention.1} parent=11 // pred_check_branch
        %164 = sbr.rel (%p162) target = $region16
      $region15: #{channel_attention.1} parent=11 // pred_region
        _
      $region16: #{channel_attention.1} parent=11 // pred_fallthru
        _
      // Predicated region
      $region17: #{channel_attention.1} parent=11 // pred_check
        %p165 = pneg %p79
      $region18: #{channel_attention.1} parent=11 // pred_check_branch
        %167 = sbr.rel (%p165) target = $region20
      $region19: #{channel_attention.1} parent=11 // pred_region
        _
      $region20: #{channel_attention.1} parent=11 // pred_fallthru
        _
      // Predicated region
      $region21: #{channel_attention.1} parent=11 // pred_check
        %p168 = pneg %p100
      $region22: #{channel_attention.1} parent=11 // pred_check_branch
        %170 = sbr.rel (%p168) target = $region24
      $region23: #{channel_attention.1} parent=11 // pred_region
        _
      $region24: #{channel_attention.1} parent=11 // pred_fallthru
        _
      // Predicated region
      $region25: #{channel_attention.1} parent=11 // pred_check
        %p171 = pneg %p121
      $region26: #{channel_attention.1} parent=11 // pred_check_branch
        %173 = sbr.rel (%p171) target = $region28
      $region27: #{channel_attention.1} parent=11 // pred_region
        _
      $region28: #{channel_attention.1} parent=11 // pred_fallthru
        _
    $region12: #{channel_attention.1} parent=5 // pred_fallthru
      _
    %p174 = scmp.lt.s32.totalorder %s11, 2
    // Predicated region
    $region29: #{channel_attention.1} parent=5 // pred_check
      %p175 = pneg %p174
    $region30: #{channel_attention.1} parent=5 // pred_check_branch
      %177 = sbr.rel (%p175) target = $region32
    $region31: #{channel_attention.1} parent=5 // pred_region
      // Predicated region
      $region33: #{channel_attention.1} parent=31 // pred_check
        %p178 = pneg %p31
      $region34: #{channel_attention.1} parent=31 // pred_check_branch
        %180 = sbr.rel (%p178) target = $region36
      $region35: #{channel_attention.1} parent=31 // pred_region
        %p181 = scmp.lt.s32.totalorder %s11, 1
        %s182 = scalar_select %p181, %s11, 1
        %s183 = smul.addr %s182, 16
        %s184 = smul.addr %s183, 8
        %s185 = scalar_lea.vmem %s0, %s184
      $region36: #{channel_attention.1} parent=31 // pred_fallthru
        _
    $region32: #{channel_attention.1} parent=5 // pred_fallthru
      _
    %p186 = scmp.le.s32.totalorder 1, %s11
    %p187 = scmp.lt.s32.totalorder %s11, 3
    %p188 = pnand %p186, %p187
    %p189 = pneg %p188
    // Predicated region
    $region37: #{channel_attention.1} parent=5 // pred_check
      _
    $region38: #{channel_attention.1} parent=5 // pred_check_branch
      %191 = sbr.rel (%p188) target = $region40
    $region39: #{channel_attention.1} parent=5 // pred_region
      %s192 = ssub.s32 %s11, 1
      %p193 = scmp.lt.s32.totalorder %s16, 1
      %s194 = scalar_select %p193, %s16, 1
      %s195 = smul.addr %s194, 16
      %s196 = smul.addr %s195, 8
      %s197 = scalar_lea.vmem %s0, %s196
      %p198 = pneg %p37
      %p199 = pneg %p34
      %p200 = pneg %p58
      %p201 = pneg %p55
      %p202 = pneg %p79
      %p203 = pneg %p76
      %p204 = pneg %p100
      %p205 = pneg %p97
      %p206 = pneg %p121
      %p207 = pneg %p118
      %p208 = pneg %p147
      %p209 = pneg %p144
      %p210 = scmp.lt.s32.totalorder %s16, 1
      %s211 = scalar_select %p210, %s16, 1
      %s212 = smul.addr %s211, 16
      %s213 = smul.addr %s212, 8
      %s214 = scalar_lea.vmem %s5, %s213
      %p215 = scmp.lt.s32.totalorder %s16, 1
      %s216 = scalar_select %p215, %s16, 1
      %s217 = smul.addr %s216, 16
      %s218 = smul.addr %s217, 8
      %s219 = scalar_lea.vmem %s0, %s218
      %p220 = scmp.lt.s32.totalorder %s16, 1
      %s221 = scalar_select %p220, %s16, 1
      %s222 = smul.addr %s221, 16
      %s223 = smul.addr %s222, 8
      %s224 = scalar_lea.vmem %s5, %s223
      %v225 = vld [vmem:[%s219] sm:$0xff]
      %v226 = vld [vmem:[%s219 + $0x8] sm:$0xff]
      %v227 = vld [vmem:[%s219 + $0x10] sm:$0xff]
      %v228 = vld [vmem:[%s219 + $0x18] sm:$0xff]
      %v229 = vld [vmem:[%s219 + $0x20] sm:$0xff]
      %v230 = vld [vmem:[%s219 + $0x28] sm:$0xff]
      %v231 = vld [vmem:[%s219 + $0x30] sm:$0xff]
      %v232 = vld [vmem:[%s219 + $0x38] sm:$0xff]
      %v233 = vld [vmem:[%s219 + $0x40] sm:$0xff]
      %v234 = vld [vmem:[%s219 + $0x48] sm:$0xff]
      %v235 = vld [vmem:[%s219 + $0x50] sm:$0xff]
      %v236 = vld [vmem:[%s219 + $0x58] sm:$0xff]
      %v237 = vld [vmem:[%s219 + $0x60] sm:$0xff]
      %v238 = vld [vmem:[%s219 + $0x68] sm:$0xff]
      %v239 = vld [vmem:[%s219 + $0x70] sm:$0xff]
      %v240 = vld [vmem:[%s219 + $0x78] sm:$0xff]
      %v241 = vadd.f32 %v225, %v226
      %242 = vadd.xlane.f32.xlu0 %v241
      %v243 = vpop.xlane.xlu0 %242
      %v244 = vadd.f32 %v227, %v228
      %245 = vadd.xlane.f32.xlu0 %v244
      %v246 = vpop.xlane.xlu0 %245
      %v247 = vadd.f32 %v229, %v230
      %248 = vadd.xlane.f32.xlu0 %v247
      %v249 = vpop.xlane.xlu0 %248
      %v250 = vadd.f32 %v231, %v232
      %251 = vadd.xlane.f32.xlu0 %v250
      %v252 = vpop.xlane.xlu0 %251
      %v253 = vadd.f32 %v233, %v234
      %254 = vadd.xlane.f32.xlu0 %v253
      %v255 = vpop.xlane.xlu0 %254
      %v256 = vadd.f32 %v235, %v236
      %257 = vadd.xlane.f32.xlu0 %v256
      %v258 = vpop.xlane.xlu0 %257
      %v259 = vadd.f32 %v237, %v238
      %260 = vadd.xlane.f32.xlu0 %v259
      %v261 = vpop.xlane.xlu0 %260
      %v262 = vadd.f32 %v239, %v240
      %263 = vadd.xlane.f32.xlu0 %v262
      %v264 = vpop.xlane.xlu0 %263
      %v265 = vmul.f32 %v243, 0.00390625
      %v266 = vmul.f32 %v246, 0.00390625
      %v267 = vmul.f32 %v249, 0.00390625
      %v268 = vmul.f32 %v252, 0.00390625
      %v269 = vmul.f32 %v255, 0.00390625
      %v270 = vmul.f32 %v258, 0.00390625
      %v271 = vmul.f32 %v261, 0.00390625
      %v272 = vmul.f32 %v264, 0.00390625
      %v273 = vmax.f32 %v225, %v226
      %274 = vmax.xlane.f32.xlu0 %v273
      %v275 = vpop.xlane.xlu0 %274
      %v276 = vmax.f32 %v227, %v228
      %277 = vmax.xlane.f32.xlu0 %v276
      %v278 = vpop.xlane.xlu0 %277
      %v279 = vmax.f32 %v229, %v230
      %280 = vmax.xlane.f32.xlu0 %v279
      %v281 = vpop.xlane.xlu0 %280
      %v282 = vmax.f32 %v231, %v232
      %283 = vmax.xlane.f32.xlu0 %v282
      %v284 = vpop.xlane.xlu0 %283
      %v285 = vmax.f32 %v233, %v234
      %286 = vmax.xlane.f32.xlu0 %v285
      %v287 = vpop.xlane.xlu0 %286
      %v288 = vmax.f32 %v235, %v236
      %289 = vmax.xlane.f32.xlu0 %v288
      %v290 = vpop.xlane.xlu0 %289
      %v291 = vmax.f32 %v237, %v238
      %292 = vmax.xlane.f32.xlu0 %v291
      %v293 = vpop.xlane.xlu0 %292
      %v294 = vmax.f32 %v239, %v240
      %295 = vmax.xlane.f32.xlu0 %v294
      %v296 = vpop.xlane.xlu0 %295
      %v305 = vlaneseq
      %v306 = vand.u32 %v305, 127
      %v307 = vperm.slane %v265, %v306
      %v308 = vadd.s32 %v306, 4294967288
      %v309 = vperm.slane %v266, %v308
      %vm310 = vcmask 130112
      %v311 = vsel %vm310, %v309, %v307
      %v312 = vadd.s32 %v306, 4294967280
      %v313 = vperm.slane %v267, %v312
      %vm314 = vcmask 195712
      %v315 = vsel %vm314, %v313, %v311
      %v316 = vadd.s32 %v306, 4294967272
      %v317 = vperm.slane %v268, %v316
      %vm318 = vcmask 261312
      %v319 = vsel %vm318, %v317, %v315
      %v320 = vadd.s32 %v306, 4294967264
      %v321 = vperm.slane %v269, %v320
      %vm322 = vcmask 326912
      %v323 = vsel %vm322, %v321, %v319
      %v324 = vadd.s32 %v306, 4294967256
      %v325 = vperm.slane %v270, %v324
      %vm326 = vcmask 392512
      %v327 = vsel %vm326, %v325, %v323
      %v328 = vadd.s32 %v306, 4294967248
      %v329 = vperm.slane %v271, %v328
      %vm330 = vcmask 458112
      %v331 = vsel %vm330, %v329, %v327
      %v332 = vadd.s32 %v306, 4294967240
      %v333 = vperm.slane %v272, %v332
      %vm334 = vcmask 523712
      %v335 = vsel %vm334, %v333, %v331
      %v345 = vperm.slane %v275, %v306
      %v346 = vperm.slane %v278, %v308
      %v347 = vsel %vm310, %v346, %v345
      %v348 = vperm.slane %v281, %v312
      %v349 = vsel %vm314, %v348, %v347
      %v350 = vperm.slane %v284, %v316
      %v351 = vsel %vm318, %v350, %v349
      %v352 = vperm.slane %v287, %v320
      %v353 = vsel %vm322, %v352, %v351
      %v354 = vperm.slane %v290, %v324
      %v355 = vsel %vm326, %v354, %v353
      %v356 = vperm.slane %v293, %v328
      %v357 = vsel %vm330, %v356, %v355
      %v358 = vperm.slane %v296, %v332
      %v359 = vsel %vm334, %v358, %v357
      %vm361 = vcmask 1040384
      %v362 = vsel %vm361, %v335, %v359
      %v363 = vld [vmem:[%s1] sm:$0xff]
      %v364 = vld [vmem:[%s1 + $0x8] sm:$0xff]
      %v365 = vld [vmem:[%s1 + $0x10] sm:$0xff]
      %v366 = vld [vmem:[%s1 + $0x18] sm:$0xff]
      %v367 = vld [vmem:[%s1 + $0x20] sm:$0xff]
      %v368 = vld [vmem:[%s1 + $0x28] sm:$0xff]
      %v369 = vld [vmem:[%s1 + $0x30] sm:$0xff]
      %v370 = vld [vmem:[%s1 + $0x38] sm:$0xff]
      %v371 = vld [vmem:[%s2] sm:$0x1]
      %v373 = vperm.slane %v371, 0
      %vm375 = vcmask 523264
      %v377 = vsel %vm375, %v362, 0
      %379 = vmatpush.msra.mxu0 0.0
      %380 = vmatpush.msra.mxu0 0.0
      %381 = vmatpush.msra.mxu0 0.0
      %382 = vmatpush.msra.mxu0 0.0
      %383 = vmatpush.msra.mxu0 0.0
      %384 = vmatpush.msra.mxu0 0.0
      %385 = vmatpush.msra.mxu0 0.0
      %386 = vmatpush.msra.mxu0 0.0
      %387 = vmatpush.msra.mxu0 %v370
      %388 = vmatpush.msra.mxu0 %v369
      %389 = vmatpush.msra.mxu0 %v368
      %390 = vmatpush.msra.mxu0 %v367
      %391 = vmatpush.msra.mxu0 %v366
      %392 = vmatpush.msra.mxu0 %v365
      %393 = vmatpush.msra.mxu0 %v364
      %394 = vmatpush.msra.mxu0 %v363
      %395 = vmatmul.f32.gmra.mxu0 %v377
      %v396 = vpop.f32.mrf.mxu0
      %v397 = vadd.f32 %v373, %v396
      %398 = vdwg.mxu0
      %v399 = vmax.f32 %v397, 0.0
      %v401 = vrot.slane %v399, 1
      %v403 = vadd.f32 %v399, %v401
      %v404 = vld [vmem:[%s3] sm:$0xf]
      %v405 = vld [vmem:[%s4] sm:$0x1]
      %v406 = vmul.f32 %v405, 2.0
      %vm407 = vcmask 31744
      %v409 = vsel %vm407, %v403, 0
      %vm411 = vcmask 1043456
      %v413 = vsel %vm411, %v404, 0
      %415 = vmatpush.msra.mxu0 0.0
      %416 = vmatpush.msra.mxu0 0.0
      %417 = vmatpush.msra.mxu0 0.0
      %418 = vmatpush.msra.mxu0 0.0
      %419 = vmatpush.msra.mxu0 0.0
      %420 = vmatpush.msra.mxu0 0.0
      %421 = vmatpush.msra.mxu0 0.0
      %422 = vmatpush.msra.mxu0 0.0
      %423 = vmatpush.msra.mxu0 0.0
      %424 = vmatpush.msra.mxu0 0.0
      %425 = vmatpush.msra.mxu0 0.0
      %426 = vmatpush.msra.mxu0 0.0
      %427 = vmatpush.msra.mxu0 0.0
      %428 = vmatpush.msra.mxu0 0.0
      %429 = vmatpush.msra.mxu0 0.0
      %430 = vmatpush.msra.mxu0 %v413
      %431 = vmatmul.f32.gmra.mxu0 %v409
      %v432 = vpop.f32.mrf.mxu0
      %v433 = vadd.f32 %v406, %v432
      %434 = vdwg.mxu0
      %v435 = vsub.f32 0.0, %v433
      %v436 = vmul.f32 %v435, 1.442695
      %v437 = vpow.pop %v436
      %v438 = vadd.f32 %v437, 1.0
      %v439 = vrcp.pop %v438
      %v440 = vmul.f32 %v438, %v439
      %v441 = vsub.f32 1.0, %v440
      %v442 = vmul.f32 %v439, %v441
      %v443 = vadd.f32 %v439, %v442
      %vm444 = vweird.f32 %v438
      %vm445 = vweird.f32 %v439
      %vm446 = vmor %vm444, %vm445
      %v447 = vsel %vm446, %v439, %v443
      %v448 = vand.u32 2147483647, %v438
      %vm449 = vcmp.eq.f32.partialorder %v448, 8.507059e+37
      %v450 = vand.u32 %v438, 2147483648
      %v451 = vor.u32 1.1754944e-38, %v450
      %v452 = vsel %vm449, %v451, %v447
      %v453 = vmul.f32 1.0, %v452
      %v454 = vperm.slane %v453, 0
      %v455 = vlaneseq
      %v456 = vshrl.u32 %v455, 7
      %458 = vset.pattern.permute.xlu0 %v456
      %459 = vperm.xlu0 %458, %v454
      %v460 = vpop.permute.xlu0 %459
      %v461 = vlaneseq
      %v462 = vshrl.u32 %v461, 7
      %v463 = vadd.s32 %v462, 8
      %464 = vset.pattern.permute.xlu0 %v463
      %465 = vperm.xlu0 %464, %v454
      %v466 = vpop.permute.xlu0 %465
      %v467 = vlaneseq
      %v468 = vshrl.u32 %v467, 7
      %v469 = vadd.s32 %v468, 16
      %470 = vset.pattern.permute.xlu0 %v469
      %471 = vperm.xlu0 %470, %v454
      %v472 = vpop.permute.xlu0 %471
      %v473 = vlaneseq
      %v474 = vshrl.u32 %v473, 7
      %v475 = vadd.s32 %v474, 24
      %476 = vset.pattern.permute.xlu0 %v475
      %477 = vperm.xlu0 %476, %v454
      %v478 = vpop.permute.xlu0 %477
      %v479 = vlaneseq
      %v480 = vshrl.u32 %v479, 7
      %v481 = vadd.s32 %v480, 32
      %482 = vset.pattern.permute.xlu0 %v481
      %483 = vperm.xlu0 %482, %v454
      %v484 = vpop.permute.xlu0 %483
      %v485 = vlaneseq
      %v486 = vshrl.u32 %v485, 7
      %v487 = vadd.s32 %v486, 40
      %488 = vset.pattern.permute.xlu0 %v487
      %489 = vperm.xlu0 %488, %v454
      %v490 = vpop.permute.xlu0 %489
      %v491 = vlaneseq
      %v492 = vshrl.u32 %v491, 7
      %v493 = vadd.s32 %v492, 48
      %494 = vset.pattern.permute.xlu0 %v493
      %495 = vperm.xlu0 %494, %v454
      %v496 = vpop.permute.xlu0 %495
      %v497 = vlaneseq
      %v498 = vshrl.u32 %v497, 7
      %v499 = vadd.s32 %v498, 56
      %500 = vset.pattern.permute.xlu0 %v499
      %501 = vperm.xlu0 %500, %v454
      %v502 = vpop.permute.xlu0 %501
      %v503 = vmul.f32 %v225, %v460
      %v504 = vmul.f32 %v226, %v460
      %v505 = vmul.f32 %v227, %v466
      %v506 = vmul.f32 %v228, %v466
      %v507 = vmul.f32 %v229, %v472
      %v508 = vmul.f32 %v230, %v472
      %v509 = vmul.f32 %v231, %v478
      %v510 = vmul.f32 %v232, %v478
      %v511 = vmul.f32 %v233, %v484
      %v512 = vmul.f32 %v234, %v484
      %v513 = vmul.f32 %v235, %v490
      %v514 = vmul.f32 %v236, %v490
      %v515 = vmul.f32 %v237, %v496
      %v516 = vmul.f32 %v238, %v496
      %v517 = vmul.f32 %v239, %v502
      %v518 = vmul.f32 %v240, %v502
      %519 = vst [vmem:[%s224] sm:$0xff] %v503
      %520 = vst [vmem:[%s224 + $0x8] sm:$0xff] %v504
      %521 = vst [vmem:[%s224 + $0x10] sm:$0xff] %v505
      %522 = vst [vmem:[%s224 + $0x18] sm:$0xff] %v506
      %523 = vst [vmem:[%s224 + $0x20] sm:$0xff] %v507
      %524 = vst [vmem:[%s224 + $0x28] sm:$0xff] %v508
      %525 = vst [vmem:[%s224 + $0x30] sm:$0xff] %v509
      %526 = vst [vmem:[%s224 + $0x38] sm:$0xff] %v510
      %527 = vst [vmem:[%s224 + $0x40] sm:$0xff] %v511
      %528 = vst [vmem:[%s224 + $0x48] sm:$0xff] %v512
      %529 = vst [vmem:[%s224 + $0x50] sm:$0xff] %v513
      %530 = vst [vmem:[%s224 + $0x58] sm:$0xff] %v514
      %531 = vst [vmem:[%s224 + $0x60] sm:$0xff] %v515
      %532 = vst [vmem:[%s224 + $0x68] sm:$0xff] %v516
      %533 = vst [vmem:[%s224 + $0x70] sm:$0xff] %v517
      %534 = vst [vmem:[%s224 + $0x78] sm:$0xff] %v518
      %p535 = scmp.lt.s32.totalorder %s16, 1
      %s536 = scalar_select %p535, %s16, 1
      %s537 = smul.addr %s536, 16
      %s538 = smul.addr %s537, 8
      %s539 = scalar_lea.vmem %s5, %s538
      // Predicated region
      $region41: #{channel_attention.1} parent=39 // pred_check
        %p540 = pneg %p144
      $region42: #{channel_attention.1} parent=39 // pred_check_branch
        %542 = sbr.rel (%p540) target = $region44
      $region43: #{channel_attention.1} parent=39 // pred_region
        _
      $region44: #{channel_attention.1} parent=39 // pred_fallthru
        _
    $region40: #{channel_attention.1} parent=5 // pred_fallthru
      _
    %p543 = scmp.le.s32.totalorder 2, %s11
    // Predicated region
    $region45: #{channel_attention.1} parent=5 // pred_check
      %p544 = pneg %p543
    $region46: #{channel_attention.1} parent=5 // pred_check_branch
      %546 = sbr.rel (%p544) target = $region48
    $region47: #{channel_attention.1} parent=5 // pred_region
      %s547 = ssub.s32 %s11, 2
      // Predicated region
      $region49: #{channel_attention.1} parent=47 // pred_check
        %p548 = pneg %p150
      $region50: #{channel_attention.1} parent=47 // pred_check_branch
        %550 = sbr.rel (%p548) target = $region52
      $region51: #{channel_attention.1} parent=47 // pred_region
        %p551 = scmp.lt.s32.totalorder %s17, 1
        %s552 = scalar_select %p551, %s17, 1
        %s553 = smul.addr %s552, 16
        %s554 = smul.addr %s553, 8
        %s555 = scalar_lea.vmem %s5, %s554
      $region52: #{channel_attention.1} parent=47 // pred_fallthru
        _
    $region48: #{channel_attention.1} parent=5 // pred_fallthru
      _
  $region6: #{channel_attention.1} parent=0 // loop_footer
    %s15 = sadd.s32 1, %s11
  $region7: #{channel_attention.1} parent=0 // loop_footer_branch
    %10 = sbr.rel target = $region3
  $region8: #{channel_attention.1} parent=0 // loop_exit
    _

</llo_original>
